<compile_context>
chip_gen: v7x
topology: tpu7x:2x2x1
jax: 0.10.0
libtpu: 0.0.40
codegen_flags: <defaults>
</compile_context>

<pallas_src>
import jax
import jax.numpy as jnp
from jax.experimental import pallas as pl
from jax.experimental.pallas import tpu as pltpu

_MAX_CHUNKS = 8             # a handful of concurrent DMAs saturates HBM
_MIN_CHUNK_BYTES = 8 << 20  # keep each DMA multi-MiB so descriptor cost is noise


def _build_dma_copy_kernel(row_chunks, total_rows):
    """Build a kernel copying an (total_rows, D) slab HBM->HBM in len(row_chunks) DMAs."""
    n_chunks = len(row_chunks)

    def kernel(x_ref, o_ref, sems):
        copies = []
        if n_chunks == 1 and row_chunks[0] == (0, total_rows):
            # Whole-array copy: single DMA over the full refs.
            cp = pltpu.make_async_copy(x_ref, o_ref, sems.at[0])
            cp.start()
            copies.append(cp)
        else:
            for idx, (start, size) in enumerate(row_chunks):
                cp = pltpu.make_async_copy(
                    x_ref.at[pl.ds(start, size), :],   # static slices: free
                    o_ref.at[pl.ds(start, size), :],
                    sems.at[idx],
                )
                cp.start()
                copies.append(cp)
        # All chunk DMAs are now in flight concurrently; block on completion.
        for cp in copies:
            cp.wait()

    return kernel


def flatten_layer(x, *, alias_input=False, max_chunks=_MAX_CHUNKS):
    """Pallas equivalent of FlattenLayer.forward: (N, ...) -> (N, prod(...))."""
    n = x.shape[0]
    d = 1
    for s in x.shape[1:]:
        d *= s

    # Metadata-only row-major collapse; identical element order to torch .view.
    x2 = x.reshape(n, d)

    if alias_input or n * d == 0:
        # Donated input (or empty tensor): the flattened result IS the reshape
        # above -- zero bytes need to move, so skip the kernel entirely rather
        # than issue a degenerate src==dst self-copy.
        return x2

    itemsize = jnp.dtype(x.dtype).itemsize
    total_bytes = n * d * itemsize

    # A handful of large row chunks -> several outstanding DMAs; each chunk
    # stays >= _MIN_CHUNK_BYTES (or the whole array when it is small).
    num_chunks = int(max(1, min(max_chunks, n, total_bytes // _MIN_CHUNK_BYTES)))
    base, rem = divmod(n, num_chunks)
    row_chunks = []
    start = 0
    for i in range(num_chunks):
        size = base + (1 if i < rem else 0)
        if size > 0:
            row_chunks.append((start, size))
            start += size
    row_chunks = tuple(row_chunks)

    out = pl.pallas_call(
        _build_dma_copy_kernel(row_chunks, n),
        out_shape=jax.ShapeDtypeStruct((n, d), x.dtype),
        # Raw HBM refs on both sides: the DMA engines do the copy directly,
        # bypassing VMEM (and the 64 MiB v7x VMEM ceiling) completely.
        in_specs=[pl.BlockSpec(memory_space=pl.ANY)],
        out_specs=pl.BlockSpec(memory_space=pl.ANY),
        scratch_shapes=[pltpu.SemaphoreType.DMA((len(row_chunks),))],
        cost_estimate=pl.CostEstimate(
            flops=0, transcendentals=0, bytes_accessed=2 * total_bytes),
    )(x2)
    return out


if __name__ == "__main__":
    # FlattenLayer has no parameters to initialize.
    key = jax.random.PRNGKey(0)
    x = jax.random.normal(key, (2, 4, 16, 16), dtype=jnp.float32)  # NCHW

    y = jax.block_until_ready(flatten_layer(x))

    assert y.shape == (2, 4 * 16 * 16), y.shape
    ref = x.reshape(x.shape[0], -1)  # same semantics as torch .view(N, -1)
    assert bool(jnp.array_equal(y, ref))

    print("KERNEL_OK")
</pallas_src>

<mosaic_0001>
module attributes {stable_mosaic.version = 11 : i64} {
  func.func @kernel(%arg0: memref<2x1024xf32, #tpu.memory_space<any>>, %arg1: memref<2x1024xf32, #tpu.memory_space<any>>, %arg2: memref<1x!tpu.dma_semaphore, #tpu.memory_space<semaphore_mem>>) attributes {dimension_semantics = [], scalar_prefetch = 0 : i64, scratch_operands = 1 : i64, tpu.core_type = #tpu.core_type<tc>} {
    %c0_i32 = arith.constant 0 : i32
    %0 = tpu.memref_slice %arg2[%c0_i32] : memref<1x!tpu.dma_semaphore, #tpu.memory_space<semaphore_mem>> -> memref<1x!tpu.dma_semaphore, #tpu.memory_space<semaphore_mem>>
    %1 = tpu.memref_squeeze %0 : memref<1x!tpu.dma_semaphore, #tpu.memory_space<semaphore_mem>> -> memref<!tpu.dma_semaphore, #tpu.memory_space<semaphore_mem>>
    tpu.enqueue_dma source(%arg0 : memref<2x1024xf32, #tpu.memory_space<any>>) target(%arg1 : memref<2x1024xf32, #tpu.memory_space<any>>) target_semaphore(%1 : memref<!tpu.dma_semaphore, #tpu.memory_space<semaphore_mem>>)
    %c0_i32_0 = arith.constant 0 : i32
    %2 = tpu.memref_slice %arg2[%c0_i32_0] : memref<1x!tpu.dma_semaphore, #tpu.memory_space<semaphore_mem>> -> memref<1x!tpu.dma_semaphore, #tpu.memory_space<semaphore_mem>>
    %3 = tpu.memref_squeeze %2 : memref<1x!tpu.dma_semaphore, #tpu.memory_space<semaphore_mem>> -> memref<!tpu.dma_semaphore, #tpu.memory_space<semaphore_mem>>
    tpu.wait_dma2 semaphore(%3 : memref<!tpu.dma_semaphore, #tpu.memory_space<semaphore_mem>>) src(%arg0 : memref<2x1024xf32, #tpu.memory_space<any>>) dst(%arg1 : memref<2x1024xf32, #tpu.memory_space<any>>)
    return
  }
}

</mosaic_0001>

<llo_original>
// kernel: tpu_custom_call.1
$region0: #{tpu_custom_call.1}
  #allocation0 [shape = 'u32[]', space=smem, size = 0x4, offset = 0x4, fixed_abs, tag = 'smem constant byte address 0x4 - core index']
  #allocation1 [shape = 'u32[144,128]{1,0:T(1,128)}', space=vmem, size = 0x12000, scoped, tag = 'internal scratch']
  #allocation2 [shape = 's32[1]{0}', space=sflag, size = 0x4, scoped, tag = 'scratch operand']
  #allocation3 [shape = 's32[]', space=sflag, size = 0x4, offset = 0, fixed_abs, tag = 'sflag constant byte address 0x0 - dummy sync flag']
  #allocation4 [shape = 'u32[0]{0}', space=smem, size = 0, offset = 0, fixed_abs, tag = 'smem constant byte address 0x0 - null']
  %s0 = inlined_call_operand.hbm [shape: f32[2,1024], index: 0, kind: input, shape index: {}]
  %s1 = inlined_call_operand.hbm [shape: f32[2,1024], index: 1, kind: output, shape index: {}]
  %s2 = sld [smem:[#allocation0]]
  $region2: #{tpu_custom_call.1} parent=0
    _
  %s4 = ssub.s32 1, %s2
  %s5 = scalar_select 0, %s4, %s2
  %s7 = sshll.u32 1, 14
  %s8 = sxor.u32 4294967295, %s7
  %s11 = sshll.u32 3, 24
  %s12 = sxor.u32 4294967295, %s11
  %s13 = sand.u32 0, %s12
  %s15 = sor.u32 %s13, 0
  %18 = dma.general %s0, 256, %s1, [#allocation2], [#allocation3], [#allocation4], %s15, 0
  %s19 = smul.u32 2, 1
  %s20 = smul.u32 %s19, 8
  %s21 = sshll.u32 %s20, 4
  %22 = dma.done [#allocation2], %s21
  %23 = vsyncmov [#allocation2]
  %s24 = vpop.sfrf %23
  %p25 = scmp.eq.s32.totalorder %s24, 0
  %p26 = pneg %p25
  %28 = shalt.err (%p26)

</llo_original>
